<compile_context>
chip_gen: v5e
topology: v5e:2x2
jax: 0.10.0
libtpu: 0.0.40
codegen_flags: <defaults>
</compile_context>

<pallas_src>
import functools

import jax
import jax.numpy as jnp
from jax.experimental import pallas as pl
from jax.experimental.pallas import tpu as pltpu


def _decoder_norm_kernel(x_ref, params_ref, o_ref, *, features, eps):
    # x_ref: (ROW_TILE, F); params_ref: (2, F) with row 0 = alpha, row 1 = bias.
    x = x_ref[...].astype(jnp.float32)
    mean = jnp.mean(x, axis=-1, keepdims=True)
    diff = x - mean
    # torch.std default is the unbiased estimator (ddof=1).
    var = jnp.sum(diff * diff, axis=-1, keepdims=True) * jnp.float32(
        1.0 / (features - 1))
    std = jnp.sqrt(var)
    # Exact per-row reciprocal on the (ROW_TILE, 1) column: essentially free
    # in this HBM-bound kernel and keeps full f32 precision.
    inv = pl.reciprocal(std + jnp.float32(eps), approx=False)
    p = params_ref[...].astype(jnp.float32)
    alpha = p[0:1, :]
    bias = p[1:2, :]
    o_ref[...] = ((diff * inv) * alpha + bias).astype(o_ref.dtype)


def _vmem_limits():
    """Generation-aware scoped-VMEM limit and per-tile VMEM budget."""
    try:
        cap = pltpu.get_tpu_info().vmem_capacity_bytes
    except Exception:
        cap = 64 * 1024 * 1024  # conservative fallback (v7x per-TC VMEM)
    vmem_limit = min(cap // 2, 64 * 1024 * 1024)   # 64 MiB on v5e/v6e, 32 on v7x
    tile_budget = vmem_limit // 2                  # leave pipeline headroom
    return vmem_limit, tile_budget


def _choose_row_tile(rows, features, itemsize, target_block_bytes,
                     vmem_budget_bytes):
    """Pick a sublane-aligned, VMEM-budgeted, balanced row tile."""
    # Rows per packed vreg sublane group: f32 -> 8, bf16/f16 -> 16, int8 -> 32.
    sub = max(8, 32 // itemsize)
    rows_sub = pl.cdiv(rows, sub) * sub

    # Rows implied by the target per-block byte size (input block).
    tile = max(sub, (target_block_bytes // (features * itemsize)) // sub * sub)

    # VMEM ceiling: double-buffered in+out blocks (2 bufs * 2 streams) plus
    # ~3 f32 temporaries (x_f32, diff, scaled) per row of the live tile.
    per_row_bytes = 4 * features * itemsize + 3 * features * 4
    max_rows_vmem = max(sub, (vmem_budget_bytes // per_row_bytes) // sub * sub)
    tile = min(tile, max_rows_vmem)

    # Never larger than the (sublane-rounded) row count.
    tile = min(tile, rows_sub)

    # Give the v7x megacore >= 2 grid steps when the halves are still >= 1 MiB
    # blocks (no-op for small inputs and on v5e/v6e it just keeps blocks big).
    if tile >= rows_sub:
        half = pl.cdiv(rows_sub // 2, sub) * sub if rows_sub >= 2 * sub else 0
        if half >= sub and half * features * itemsize >= (1 << 20):
            tile = half

    # Balance tiles across the grid so the last block is not tiny/ragged.
    n_steps = pl.cdiv(rows_sub, tile)
    tile = pl.cdiv(pl.cdiv(rows_sub, n_steps), sub) * sub
    return max(sub, tile)


def decoder_forward(x, encoder_output, src_mask, tgt_mask, alpha, bias,
                    *, eps=1e-6, target_block_bytes=4 * 1024 * 1024):
    """Pallas implementation of Decoder.forward.

    x:              (B, S, F)  decoder input
    encoder_output: (B, S_enc, F)  (unused: layer stack is identity here)
    src_mask, tgt_mask: masks forwarded to the (identity) layers.
    alpha, bias:    (F,) layer-norm parameters.
    """
    # TODO(synk): the nn.ModuleList `layers` is supplied externally to Decoder
    # and is not defined by this module; it is treated as an identity stack.
    del encoder_output, src_mask, tgt_mask

    B, S, F = x.shape
    rows = B * S
    itemsize = jnp.dtype(x.dtype).itemsize

    vmem_limit, tile_budget = _vmem_limits()
    tile = _choose_row_tile(rows, F, itemsize, target_block_bytes, tile_budget)
    grid = pl.cdiv(rows, tile)

    # No wrapper-side padding: Pallas masks the ragged last block's
    # loads/stores when `tile` does not divide `rows`.
    x2d = x.reshape(rows, F)

    # Fuse alpha/bias into one (2, F) slab: one DMA stream / one buffer pair.
    params = jnp.concatenate(
        [alpha.reshape(1, F), bias.reshape(1, F)], axis=0)

    kernel = functools.partial(_decoder_norm_kernel, features=F, eps=eps)

    out2d = pl.pallas_call(
        kernel,
        out_shape=jax.ShapeDtypeStruct((rows, F), x.dtype),
        grid_spec=pltpu.PrefetchScalarGridSpec(
            num_scalar_prefetch=0,
            grid=(grid,),
            in_specs=[
                pl.BlockSpec((tile, F), lambda i: (i, 0)),
                pl.BlockSpec((2, F), lambda i: (0, 0)),
            ],
            out_specs=pl.BlockSpec((tile, F), lambda i: (i, 0)),
        ),
        compiler_params=pltpu.CompilerParams(
            dimension_semantics=("parallel",),
            vmem_limit_bytes=vmem_limit,
        ),
    )(x2d, params)

    return out2d.reshape(B, S, F)


if __name__ == "__main__":
    key = jax.random.PRNGKey(0)
    # F=128 keeps the lane axis dense (full 128-lane vregs / unmasked stores).
    B, S, S_ENC, F = 2, 8, 8, 128

    kx, kenc = jax.random.split(key)
    x = jax.random.normal(kx, (B, S, F), dtype=jnp.float32)
    encoder_output = jax.random.normal(kenc, (B, S_ENC, F), dtype=jnp.float32)
    src_mask = jnp.ones((B, 1, 1, S_ENC), dtype=jnp.float32)
    tgt_mask = jnp.tril(jnp.ones((S, S), dtype=jnp.float32))[None, None]

    # Deterministic parameter init matching layernormalization.__init__:
    # alpha = ones(features), bias = zeros(features).
    alpha = jnp.ones((F,), dtype=jnp.float32)
    bias = jnp.zeros((F,), dtype=jnp.float32)

    out = decoder_forward(x, encoder_output, src_mask, tgt_mask, alpha, bias)
    jax.block_until_ready(out)

    # Sanity check against a pure-JAX reference of the same math.
    mean = jnp.mean(x, axis=-1, keepdims=True)
    std = jnp.sqrt(jnp.sum((x - mean) ** 2, axis=-1, keepdims=True) / (F - 1))
    ref = alpha * (x - mean) / (std + 1e-6) + bias
    assert jnp.allclose(out, ref, atol=1e-4, rtol=1e-4), "mismatch vs reference"

    print("KERNEL_OK")
</pallas_src>

<mosaic_0001>
module attributes {stable_mosaic.version = 11 : i64} {
  func.func @_decoder_norm_kernel(%arg0: i32, %arg1: memref<16x128xf32, #tpu.memory_space<vmem>>, %arg2: memref<2x128xf32, #tpu.memory_space<vmem>>, %arg3: memref<16x128xf32, #tpu.memory_space<vmem>>) attributes {dimension_semantics = [#tpu.dimension_semantics<parallel>], iteration_bounds = array<i64: 1>, scalar_prefetch = 0 : i64, scratch_operands = 0 : i64, tpu.core_type = #tpu.core_type<tc>, window_params = [{transform_indices = @transform_0, window_bounds = array<i64: 16, 128>}, {pipeline_mode = #tpu.pipeline_mode<synchronous>, transform_indices = @transform_1, window_bounds = array<i64: 2, 128>}, {transform_indices = @transform_2, window_bounds = array<i64: 16, 128>}]} {
    %c0 = arith.constant 0 : index
    %c0_0 = arith.constant 0 : index
    %0 = vector.load %arg1[%c0, %c0_0] : memref<16x128xf32, #tpu.memory_space<vmem>>, vector<16x128xf32>
    %cst = arith.constant dense<0.000000e+00> : vector<16xf32>
    %1 = vector.multi_reduction <add>, %0, %cst [1] : vector<16x128xf32> to vector<16xf32>
    %2 = vector.shape_cast %1 : vector<16xf32> to vector<16x1xf32>
    %cst_1 = arith.constant 1.280000e+02 : f32
    %3 = vector.broadcast %cst_1 : f32 to vector<16x1xf32>
    %4 = arith.divf %2, %3 : vector<16x1xf32>
    %5 = vector.broadcast %4 : vector<16x1xf32> to vector<16x128xf32>
    %6 = arith.subf %0, %5 : vector<16x128xf32>
    %7 = arith.mulf %6, %6 : vector<16x128xf32>
    %cst_2 = arith.constant dense<0.000000e+00> : vector<16xf32>
    %8 = vector.multi_reduction <add>, %7, %cst_2 [1] : vector<16x128xf32> to vector<16xf32>
    %9 = vector.shape_cast %8 : vector<16xf32> to vector<16x1xf32>
    %cst_3 = arith.constant 0.00787401571 : f32
    %10 = vector.broadcast %cst_3 : f32 to vector<16x1xf32>
    %11 = arith.mulf %9, %10 : vector<16x1xf32>
    %12 = math.sqrt %11 : vector<16x1xf32>
    %cst_4 = arith.constant 9.99999997E-7 : f32
    %13 = vector.broadcast %cst_4 : f32 to vector<16x1xf32>
    %14 = arith.addf %12, %13 : vector<16x1xf32>
    %15 = tpu.reciprocal %14 : vector<16x1xf32> -> vector<16x1xf32>
    %c0_5 = arith.constant 0 : index
    %c0_6 = arith.constant 0 : index
    %16 = vector.load %arg2[%c0_5, %c0_6] : memref<2x128xf32, #tpu.memory_space<vmem>>, vector<2x128xf32>
    %17 = vector.extract_strided_slice %16 {offsets = [0, 0], sizes = [1, 128], strides = [1, 1]} : vector<2x128xf32> to vector<1x128xf32>
    %18 = vector.extract_strided_slice %16 {offsets = [1, 0], sizes = [1, 128], strides = [1, 1]} : vector<2x128xf32> to vector<1x128xf32>
    %19 = vector.broadcast %15 : vector<16x1xf32> to vector<16x128xf32>
    %20 = arith.mulf %6, %19 : vector<16x128xf32>
    %21 = vector.broadcast %17 : vector<1x128xf32> to vector<16x128xf32>
    %22 = arith.mulf %20, %21 : vector<16x128xf32>
    %23 = vector.broadcast %18 : vector<1x128xf32> to vector<16x128xf32>
    %24 = arith.addf %22, %23 : vector<16x128xf32>
    %c0_7 = arith.constant 0 : index
    %c0_8 = arith.constant 0 : index
    %25 = vector.load %arg3[%c0_7, %c0_8] : memref<16x128xf32, #tpu.memory_space<vmem>>, vector<16x128xf32>
    tpu.vector_store %arg3[%c0_7, %c0_8], %24 {strides = array<i32>} : memref<16x128xf32, #tpu.memory_space<vmem>>, vector<16x128xf32>,
    return
  }
  func.func @transform_0(%arg0: i32) -> (i32, i32) {
    %c0_i32 = arith.constant 0 : i32
    %c0_i32_0 = arith.constant 0 : i32
    return %arg0, %c0_i32 : i32, i32
  }
  func.func @transform_1(%arg0: i32) -> (i32, i32) {
    %c0_i32 = arith.constant 0 : i32
    %c0_i32_0 = arith.constant 0 : i32
    %c0_i32_1 = arith.constant 0 : i32
    return %c0_i32, %c0_i32_0 : i32, i32
  }
  func.func @transform_2(%arg0: i32) -> (i32, i32) {
    %c0_i32 = arith.constant 0 : i32
    %c0_i32_0 = arith.constant 0 : i32
    return %arg0, %c0_i32 : i32, i32
  }
}

</mosaic_0001>

<llo_original>
// kernel: tpu_custom_call.1
$region0: #{tpu_custom_call.1}
  #allocation0 [shape = 'u32[]', space=smem, size = 0x4, offset = 0x4, fixed_abs, tag = 'smem constant byte address 0x4 - core index']
  #allocation1 [shape = 'u32[72,128]{1,0:T(1,128)}', space=vmem, size = 0x9000, scoped, tag = 'internal scratch']
  %s0 = inlined_call_operand.hbm [shape: f32[16,128], index: 0, kind: input, shape index: {}]
  %s1 = inlined_call_operand.hbm [shape: f32[2,128], index: 1, kind: input, shape index: {}]
  %s2 = inlined_call_operand.hbm [shape: f32[16,128], index: 2, kind: output, shape index: {}]
  %s3 = sld [smem:[#allocation0]]
  $region26: #{tpu_custom_call.1} parent=0
    _
  %s5 = ssub.s32 1, %s3
  %s6 = scalar_select 0, %s5, %s3
  $region1: #{tpu_custom_call.1} parent=0
    #allocation2 [shape = 'u8[8192]{0}', space=vmem, size = 0x2000, scoped, tag = 'input window, operand 0, single buffered']
    #allocation3 [shape = 's32[1]{0}', space=sflag, size = 0x4, scoped, tag = 'scoped memory for tpu_custom_call.1']
    #allocation4 [shape = 's32[1]{0}', space=sflag, size = 0x4, scoped, tag = 'scoped memory for tpu_custom_call.1']
    #allocation5 [shape = 'u8[1024]{0}', space=vmem, size = 0x400, scoped, tag = 'input window, operand 1, single buffered']
    #allocation6 [shape = 's32[1]{0}', space=sflag, size = 0x4, scoped, tag = 'scoped memory for tpu_custom_call.1']
    #allocation7 [shape = 'u8[8192]{0}', space=vmem, size = 0x2000, scoped, tag = 'output window, operand 0, single buffered']
    %7 = vsyncpa [#allocation3], 0
    %8 = vsyncpa [#allocation6], 0
    %9 = vsyncpa [#allocation4], 0
    // Predicated region
    $region2: #{tpu_custom_call.1} parent=1 // pred_check
      _
    $region3: #{tpu_custom_call.1} parent=1 // pred_check_branch
      %11 = sbr.rel (0) target = $region5
    $region4: #{tpu_custom_call.1} parent=1 // pred_region
      %13 = vsyncadd [#allocation3], 0
      %s14 = sshll.u32 %s0, 4
      %s15 = int_to_ptr.hbm [resolvable:$true] %s14
      %s16 = sshll.u32 [#allocation2], 4
      %s17 = int_to_ptr.vmem [resolvable:$true] %s16
      %22 = dma.hbm_to_vmem [thread:$0]  %s15, 256, %s17, [#allocation3], 128, 128, 8
    $region5: #{tpu_custom_call.1} parent=1 // pred_fallthru
      _
    // Predicated region
    $region6: #{tpu_custom_call.1} parent=1 // pred_check
      _
    $region7: #{tpu_custom_call.1} parent=1 // pred_check_branch
      %24 = sbr.rel (0) target = $region9
    $region8: #{tpu_custom_call.1} parent=1 // pred_region
      %26 = vsyncadd [#allocation6], 0
      %s28 = sshll.u32 %s1, 4
      %s29 = int_to_ptr.hbm [resolvable:$true] %s28
      %s30 = sshll.u32 [#allocation5], 4
      %s31 = int_to_ptr.vmem [resolvable:$true] %s30
      %33 = dma.hbm_to_vmem [thread:$0]  %s29, 32, %s31, [#allocation6]
    $region9: #{tpu_custom_call.1} parent=1 // pred_fallthru
      _
    // Predicated region
    $region10: #{tpu_custom_call.1} parent=1 // pred_check
      _
    $region11: #{tpu_custom_call.1} parent=1 // pred_check_branch
      %35 = sbr.rel (0) target = $region13
    $region12: #{tpu_custom_call.1} parent=1 // pred_region
      %37 = dma.done [#allocation3], 256
    $region13: #{tpu_custom_call.1} parent=1 // pred_fallthru
      _
    // Predicated region
    $region14: #{tpu_custom_call.1} parent=1 // pred_check
      _
    $region15: #{tpu_custom_call.1} parent=1 // pred_check_branch
      %39 = sbr.rel (0) target = $region17
    $region16: #{tpu_custom_call.1} parent=1 // pred_region
      %41 = dma.done [#allocation6], 32
    $region17: #{tpu_custom_call.1} parent=1 // pred_fallthru
      _
    %v42 = vld [vmem:[#allocation2] sm:$0xff]
    %v43 = vld [vmem:[#allocation2 + $0x8] sm:$0xff]
    %44 = vadd.xlane.f32.xlu0 %v42
    %v45 = vpop.xlane.xlu0 %44
    %46 = vadd.xlane.f32.xlu0 %v43
    %v47 = vpop.xlane.xlu0 %46
    %v48 = vrcp.pop 128.0
    %v49 = vmul.f32 128.0, %v48
    %v50 = vsub.f32 1.0, %v49
    %v51 = vmul.f32 %v48, %v50
    %v52 = vadd.f32 %v48, %v51
    %vm53 = vweird.f32 %v48
    %v54 = vsel %vm53, %v48, %v52
    %v55 = vmul.f32 %v45, %v54
    %v56 = vmul.f32 %v47, %v54
    %v57 = vsub.f32 %v42, %v55
    %v58 = vsub.f32 %v43, %v56
    %v59 = vmul.f32 %v57, %v57
    %v60 = vmul.f32 %v58, %v58
    %61 = vadd.xlane.f32.xlu0 %v59
    %v62 = vpop.xlane.xlu0 %61
    %63 = vadd.xlane.f32.xlu0 %v60
    %v64 = vpop.xlane.xlu0 %63
    %v65 = vmul.f32 %v62, 0.007874016
    %v66 = vmul.f32 %v64, 0.007874016
    %v67 = vrsqrt.pop %v65
    %v68 = vmul.f32 %v67, %v65
    %v69 = vmul.f32 %v68, %v67
    %v70 = vmul.f32 0.5, %v69
    %v71 = vsub.f32 1.5, %v70
    %v72 = vmul.f32 %v67, %v71
    %v73 = vmul.f32 %v65, %v72
    %vm74 = vcmp.eq.f32.partialorder %v65, inf
    %v75 = vsel %vm74, %v65, %v73
    %vm76 = vcmp.eq.f32.partialorder %v65, 0.0
    %v77 = vand.u32 %v65, 2147483648
    %v78 = vsel %vm76, %v77, %v75
    %v79 = vrsqrt.pop %v66
    %v80 = vmul.f32 %v79, %v66
    %v81 = vmul.f32 %v80, %v79
    %v82 = vmul.f32 0.5, %v81
    %v83 = vsub.f32 1.5, %v82
    %v84 = vmul.f32 %v79, %v83
    %v85 = vmul.f32 %v66, %v84
    %vm86 = vcmp.eq.f32.partialorder %v66, inf
    %v87 = vsel %vm86, %v66, %v85
    %vm88 = vcmp.eq.f32.partialorder %v66, 0.0
    %v89 = vand.u32 %v66, 2147483648
    %v90 = vsel %vm88, %v89, %v87
    %v91 = vadd.f32 %v78, 1e-06
    %v92 = vadd.f32 %v90, 1e-06
    %v93 = vrcp.pop %v91
    %v94 = vmul.f32 %v91, %v93
    %v95 = vsub.f32 1.0, %v94
    %v96 = vmul.f32 %v93, %v95
    %v97 = vadd.f32 %v93, %v96
    %vm98 = vweird.f32 %v91
    %vm99 = vweird.f32 %v93
    %vm100 = vmor %vm98, %vm99
    %v101 = vsel %vm100, %v93, %v97
    %v102 = vand.u32 2147483647, %v91
    %vm103 = vcmp.eq.f32.partialorder %v102, 8.507059e+37
    %v104 = vand.u32 %v91, 2147483648
    %v105 = vor.u32 1.1754944e-38, %v104
    %v106 = vsel %vm103, %v105, %v101
    %v107 = vrcp.pop %v92
    %v108 = vmul.f32 %v92, %v107
    %v109 = vsub.f32 1.0, %v108
    %v110 = vmul.f32 %v107, %v109
    %v111 = vadd.f32 %v107, %v110
    %vm112 = vweird.f32 %v92
    %vm113 = vweird.f32 %v107
    %vm114 = vmor %vm112, %vm113
    %v115 = vsel %vm114, %v107, %v111
    %v116 = vand.u32 2147483647, %v92
    %vm117 = vcmp.eq.f32.partialorder %v116, 8.507059e+37
    %v118 = vand.u32 %v92, 2147483648
    %v119 = vor.u32 1.1754944e-38, %v118
    %v120 = vsel %vm117, %v119, %v115
    %v121 = vld [vmem:[#allocation5] sm:$0x3]
    %v122 = vmul.f32 %v57, %v106
    %v123 = vmul.f32 %v58, %v120
    %v124 = vperm.slane %v121, 0
    %v125 = vmul.f32 %v122, %v124
    %v126 = vmul.f32 %v123, %v124
    %v127 = vperm.slane %v121, 1
    %v128 = vadd.f32 %v125, %v127
    %v129 = vadd.f32 %v126, %v127
    %130 = vst [vmem:[#allocation7] sm:$0xff] %v128
    %131 = vst [vmem:[#allocation7 + $0x8] sm:$0xff] %v129
    // Predicated region
    $region18: #{tpu_custom_call.1} parent=1 // pred_check
      _
    $region19: #{tpu_custom_call.1} parent=1 // pred_check_branch
      %133 = sbr.rel (0) target = $region21
    $region20: #{tpu_custom_call.1} parent=1 // pred_region
      %135 = vsyncadd [#allocation4], 0
      %s136 = sshll.u32 [#allocation7], 4
      %s137 = int_to_ptr.vmem [resolvable:$true] %s136
      %s138 = sshll.u32 %s2, 4
      %s139 = int_to_ptr.hbm [resolvable:$true] %s138
      %144 = dma.vmem_to_hbm [thread:$0]  %s137, 256, %s139, [#allocation4], 128, 128, 8
    $region21: #{tpu_custom_call.1} parent=1 // pred_fallthru
      _
    // Predicated region
    $region22: #{tpu_custom_call.1} parent=1 // pred_check
      _
    $region23: #{tpu_custom_call.1} parent=1 // pred_check_branch
      %146 = sbr.rel (0) target = $region25
    $region24: #{tpu_custom_call.1} parent=1 // pred_region
      %148 = dma.done [#allocation4], 256
    $region25: #{tpu_custom_call.1} parent=1 // pred_fallthru
      _
    %149 = vsyncpa [#allocation3], 1
    %150 = vsyncpa [#allocation6], 1
    %151 = vsyncpa [#allocation4], 1

</llo_original>
